<compile_context>
chip_gen: v7x
topology: tpu7x:2x2x1
jax: 0.10.0
libtpu: 0.0.40
codegen_flags: <defaults>
</compile_context>

<pallas_src>
import jax
import jax.numpy as jnp
from jax.experimental import pallas as pl
from jax.experimental.pallas import tpu as pltpu


def _largest_divisor_le(n, cap):
    cap = int(max(1, min(n, cap)))
    for d in range(cap, 0, -1):
        if n % d == 0:
            return d
    return 1


def _choose_tiles(C, Hh, row_bytes, target_bytes):
    """Pick (c_t, ht): channels / halved-rows handled per grid step."""
    chan_bytes = Hh * row_bytes
    if Hh > 8 and chan_bytes > target_bytes:
        # One channel per step; tile the halved-row axis in multiples of 8
        # sublanes (ragged last block is masked by Pallas).
        ht = (target_bytes // row_bytes) // 8 * 8
        ht = max(8, min(ht, (Hh // 8) * 8))
        return 1, int(ht)
    # Whole channel slab(s) per step; c_t divides C so no channel raggedness.
    c_t = _largest_divisor_le(C, target_bytes // max(chan_bytes, 1))
    return int(c_t), int(Hh)


def _dwt_kernel(m_ref, x_ref, cat_ref, ll_ref):
    """Fused Haar DWT on one (1, C_t, Ht, 2W) tile.

    m_ref:   (W, W)              constant column transform: x_row @ m = [S | D]
                                 with S = 0.5*(even_col + odd_col),
                                      D = 0.5*(odd_col - even_col)
    x_ref:   (1, C_t, Ht, 2W)    each row = [even image row | odd image row]
    cat_ref: (1, 4, C_t, Ht, Wh) subbands ordered (LL, HL, LH, HH)
    ll_ref:  (1, C_t, Ht, Wh)    LL copy (first element of the module output)
    """
    w = m_ref.shape[0]
    wh = w // 2
    _, c_t, ht, _ = x_ref.shape

    m = m_ref[...]
    xall = x_ref[0].reshape(c_t * ht, 2 * w)       # dense (rows, lanes) tile
    e = xall[:, :w]                                # even image rows
    o = xall[:, w:]                                # odd image rows

    se = jnp.dot(e, m, preferred_element_type=jnp.float32)   # [S(e) | D(e)]
    so = jnp.dot(o, m, preferred_element_type=jnp.float32)   # [S(o) | D(o)]

    s = (se + so).reshape(c_t, ht, w)              # [LL | HL]
    d = (so - se).reshape(c_t, ht, w)              # [LH | HH]

    ll = s[:, :, :wh].astype(cat_ref.dtype)
    cat_ref[0, 0] = ll                             # LL
    cat_ref[0, 1] = s[:, :, wh:].astype(cat_ref.dtype)   # HL
    cat_ref[0, 2] = d[:, :, :wh].astype(cat_ref.dtype)   # LH
    cat_ref[0, 3] = d[:, :, wh:].astype(cat_ref.dtype)   # HH
    ll_ref[0] = ll


def dwt(x, *, target_block_bytes=4 << 20):
    """Haar DWT.  x: (B, C, H, W) with even H, W (NCHW, matches PyTorch).

    Returns (x_LL, x_cat) with shapes (B, C, H/2, W/2) and (B, 4C, H/2, W/2),
    identical semantics to dwt_init / DWT.forward.
    """
    B, C, H, W = x.shape
    if H % 2 or W % 2:
        raise ValueError("DWT requires even H and W, got "f"{(H, W)}")
    Hh, Wh = H // 2, W // 2
    dtype = x.dtype
    sz = dtype.itemsize

    # Constant Haar column-transform matrix (0.5 scaling baked in).
    cols = jnp.arange(Wh)
    m = jnp.zeros((W, W), jnp.float32)
    m = m.at[2 * cols, cols].set(0.5).at[2 * cols + 1, cols].set(0.5)          # S
    m = m.at[2 * cols, Wh + cols].set(-0.5).at[2 * cols + 1, Wh + cols].set(0.5)  # D
    m = m.astype(dtype)

    # Free reshape: each row now carries [even image row | odd image row].
    x2 = x.reshape(B, C, Hh, 2 * W)

    c_t, ht = _choose_tiles(C, Hh, 2 * W * sz, target_block_bytes)
    n_c = C // c_t
    n_h = pl.cdiv(Hh, ht)

    cat5, ll = pl.pallas_call(
        _dwt_kernel,
        out_shape=(jax.ShapeDtypeStruct((B, 4, C, Hh, Wh), dtype),
                   jax.ShapeDtypeStruct((B, C, Hh, Wh), dtype)),
        grid=(B, n_c, n_h),
        in_specs=[
            pl.BlockSpec((W, W), lambda b, c, h: (0, 0)),
            pl.BlockSpec((1, c_t, ht, 2 * W), lambda b, c, h: (b, c, h, 0)),
        ],
        out_specs=(
            pl.BlockSpec((1, 4, c_t, ht, Wh), lambda b, c, h: (b, 0, c, h, 0)),
            pl.BlockSpec((1, c_t, ht, Wh), lambda b, c, h: (b, c, h, 0)),
        ),
        compiler_params=pltpu.CompilerParams(
            dimension_semantics=("parallel", "parallel", "parallel")),
    )(m, x2)

    x_ll = ll
    x_cat = cat5.reshape(B, 4 * C, Hh, Wh)   # free merge: channel = q*C + c
    return x_ll, x_cat


if __name__ == "__main__":
    key = jax.random.PRNGKey(0)
    B, C, H, W = 2, 4, 16, 16
    x = jax.random.normal(key, (B, C, H, W), jnp.float32)

    fwd = jax.jit(dwt)
    x_ll, x_cat = jax.block_until_ready(fwd(x))

    assert x_ll.shape == (B, C, H // 2, W // 2), x_ll.shape
    assert x_cat.shape == (B, 4 * C, H // 2, W // 2), x_cat.shape
    assert bool(jnp.all(jnp.isfinite(x_ll))) and bool(jnp.all(jnp.isfinite(x_cat)))

    # Reference check (pure jnp, mirrors the PyTorch dwt_init exactly).
    x01 = x[:, :, 0::2, :] / 2
    x02 = x[:, :, 1::2, :] / 2
    r1 = x01[:, :, :, 0::2]
    r2 = x02[:, :, :, 0::2]
    r3 = x01[:, :, :, 1::2]
    r4 = x02[:, :, :, 1::2]
    r_ll = r1 + r2 + r3 + r4
    r_cat = jnp.concatenate(
        (r_ll, -r1 - r2 + r3 + r4, -r1 + r2 - r3 + r4, r1 - r2 - r3 + r4), axis=1)
    assert jnp.allclose(x_ll, r_ll, atol=1e-5, rtol=1e-5)
    assert jnp.allclose(x_cat, r_cat, atol=1e-5, rtol=1e-5)

    print("KERNEL_OK")
</pallas_src>

<mosaic_0001>
module attributes {stable_mosaic.version = 11 : i64} {
  func.func @_dwt_kernel(%arg0: i32, %arg1: i32, %arg2: i32, %arg3: memref<16x16xf32, #tpu.memory_space<vmem>>, %arg4: memref<1x4x8x32xf32, #tpu.memory_space<vmem>>, %arg5: memref<1x4x4x8x8xf32, #tpu.memory_space<vmem>>, %arg6: memref<1x4x8x8xf32, #tpu.memory_space<vmem>>) attributes {dimension_semantics = [#tpu.dimension_semantics<parallel>, #tpu.dimension_semantics<parallel>, #tpu.dimension_semantics<parallel>], iteration_bounds = array<i64: 2, 1, 1>, scalar_prefetch = 0 : i64, scratch_operands = 0 : i64, tpu.core_type = #tpu.core_type<tc>, window_params = [{pipeline_mode = #tpu.pipeline_mode<synchronous>, transform_indices = @transform_0, window_bounds = array<i64: 16, 16>}, {transform_indices = @transform_1, window_bounds = array<i64: 1, 4, 8, 32>}, {transform_indices = @transform_2, window_bounds = array<i64: 1, 4, 4, 8, 8>}, {transform_indices = @transform_3, window_bounds = array<i64: 1, 4, 8, 8>}]} {
    %c0 = arith.constant 0 : index
    %c0_0 = arith.constant 0 : index
    %0 = vector.load %arg3[%c0, %c0_0] : memref<16x16xf32, #tpu.memory_space<vmem>>, vector<16x16xf32>
    %c0_1 = arith.constant 0 : index
    %c0_2 = arith.constant 0 : index
    %c0_3 = arith.constant 0 : index
    %c0_4 = arith.constant 0 : index
    %1 = vector.load %arg4[%c0_1, %c0_2, %c0_3, %c0_4] : memref<1x4x8x32xf32, #tpu.memory_space<vmem>>, vector<1x4x8x32xf32>
    %2 = vector.shape_cast %1 : vector<1x4x8x32xf32> to vector<4x8x32xf32>
    %3 = vector.shape_cast %2 : vector<4x8x32xf32> to vector<32x32xf32>
    %4 = vector.extract_strided_slice %3 {offsets = [0, 0], sizes = [32, 16], strides = [1, 1]} : vector<32x32xf32> to vector<32x16xf32>
    %5 = vector.extract_strided_slice %3 {offsets = [0, 16], sizes = [32, 16], strides = [1, 1]} : vector<32x32xf32> to vector<32x16xf32>
    %cst = arith.constant dense<0.000000e+00> : vector<32x16xf32>
    %6 = tpu.matmul %4, %0, %cst {dimension_numbers = #tpu.dot_dimension_numbers<[1], [0], [0], [1], [0, 0, 1, 1], [], []>} : vector<32x16xf32>, vector<16x16xf32>, vector<32x16xf32> -> vector<32x16xf32>
    %cst_5 = arith.constant dense<0.000000e+00> : vector<32x16xf32>
    %7 = tpu.matmul %5, %0, %cst_5 {dimension_numbers = #tpu.dot_dimension_numbers<[1], [0], [0], [1], [0, 0, 1, 1], [], []>} : vector<32x16xf32>, vector<16x16xf32>, vector<32x16xf32> -> vector<32x16xf32>
    %8 = arith.addf %6, %7 : vector<32x16xf32>
    %9 = vector.shape_cast %8 : vector<32x16xf32> to vector<4x8x16xf32>
    %10 = arith.subf %7, %6 : vector<32x16xf32>
    %11 = vector.shape_cast %10 : vector<32x16xf32> to vector<4x8x16xf32>
    %12 = vector.extract_strided_slice %9 {offsets = [0, 0, 0], sizes = [4, 8, 8], strides = [1, 1, 1]} : vector<4x8x16xf32> to vector<4x8x8xf32>
    %c0_6 = arith.constant 0 : index
    %c0_7 = arith.constant 0 : index
    %c0_8 = arith.constant 0 : index
    %c0_9 = arith.constant 0 : index
    %c0_10 = arith.constant 0 : index
    %13 = vector.load %arg5[%c0_6, %c0_7, %c0_8, %c0_9, %c0_10] : memref<1x4x4x8x8xf32, #tpu.memory_space<vmem>>, vector<1x1x4x8x8xf32>
    %14 = vector.shape_cast %13 : vector<1x1x4x8x8xf32> to vector<4x8x8xf32>
    %15 = vector.shape_cast %12 : vector<4x8x8xf32> to vector<1x1x4x8x8xf32>
    tpu.vector_store %arg5[%c0_6, %c0_7, %c0_8, %c0_9, %c0_10], %15 {strides = array<i32>} : memref<1x4x4x8x8xf32, #tpu.memory_space<vmem>>, vector<1x1x4x8x8xf32>,
    %16 = vector.extract_strided_slice %9 {offsets = [0, 0, 8], sizes = [4, 8, 8], strides = [1, 1, 1]} : vector<4x8x16xf32> to vector<4x8x8xf32>
    %c0_11 = arith.constant 0 : index
    %c1 = arith.constant 1 : index
    %c0_12 = arith.constant 0 : index
    %c0_13 = arith.constant 0 : index
    %c0_14 = arith.constant 0 : index
    %17 = vector.load %arg5[%c0_11, %c1, %c0_12, %c0_13, %c0_14] : memref<1x4x4x8x8xf32, #tpu.memory_space<vmem>>, vector<1x1x4x8x8xf32>
    %18 = vector.shape_cast %17 : vector<1x1x4x8x8xf32> to vector<4x8x8xf32>
    %19 = vector.shape_cast %16 : vector<4x8x8xf32> to vector<1x1x4x8x8xf32>
    tpu.vector_store %arg5[%c0_11, %c1, %c0_12, %c0_13, %c0_14], %19 {strides = array<i32>} : memref<1x4x4x8x8xf32, #tpu.memory_space<vmem>>, vector<1x1x4x8x8xf32>,
    %20 = vector.extract_strided_slice %11 {offsets = [0, 0, 0], sizes = [4, 8, 8], strides = [1, 1, 1]} : vector<4x8x16xf32> to vector<4x8x8xf32>
    %c0_15 = arith.constant 0 : index
    %c2 = arith.constant 2 : index
    %c0_16 = arith.constant 0 : index
    %c0_17 = arith.constant 0 : index
    %c0_18 = arith.constant 0 : index
    %21 = vector.load %arg5[%c0_15, %c2, %c0_16, %c0_17, %c0_18] : memref<1x4x4x8x8xf32, #tpu.memory_space<vmem>>, vector<1x1x4x8x8xf32>
    %22 = vector.shape_cast %21 : vector<1x1x4x8x8xf32> to vector<4x8x8xf32>
    %23 = vector.shape_cast %20 : vector<4x8x8xf32> to vector<1x1x4x8x8xf32>
    tpu.vector_store %arg5[%c0_15, %c2, %c0_16, %c0_17, %c0_18], %23 {strides = array<i32>} : memref<1x4x4x8x8xf32, #tpu.memory_space<vmem>>, vector<1x1x4x8x8xf32>,
    %24 = vector.extract_strided_slice %11 {offsets = [0, 0, 8], sizes = [4, 8, 8], strides = [1, 1, 1]} : vector<4x8x16xf32> to vector<4x8x8xf32>
    %c0_19 = arith.constant 0 : index
    %c3 = arith.constant 3 : index
    %c0_20 = arith.constant 0 : index
    %c0_21 = arith.constant 0 : index
    %c0_22 = arith.constant 0 : index
    %25 = vector.load %arg5[%c0_19, %c3, %c0_20, %c0_21, %c0_22] : memref<1x4x4x8x8xf32, #tpu.memory_space<vmem>>, vector<1x1x4x8x8xf32>
    %26 = vector.shape_cast %25 : vector<1x1x4x8x8xf32> to vector<4x8x8xf32>
    %27 = vector.shape_cast %24 : vector<4x8x8xf32> to vector<1x1x4x8x8xf32>
    tpu.vector_store %arg5[%c0_19, %c3, %c0_20, %c0_21, %c0_22], %27 {strides = array<i32>} : memref<1x4x4x8x8xf32, #tpu.memory_space<vmem>>, vector<1x1x4x8x8xf32>,
    %c0_23 = arith.constant 0 : index
    %c0_24 = arith.constant 0 : index
    %c0_25 = arith.constant 0 : index
    %c0_26 = arith.constant 0 : index
    %28 = vector.load %arg6[%c0_23, %c0_24, %c0_25, %c0_26] : memref<1x4x8x8xf32, #tpu.memory_space<vmem>>, vector<1x4x8x8xf32>
    %29 = vector.shape_cast %28 : vector<1x4x8x8xf32> to vector<4x8x8xf32>
    %30 = vector.shape_cast %12 : vector<4x8x8xf32> to vector<1x4x8x8xf32>
    tpu.vector_store %arg6[%c0_23, %c0_24, %c0_25, %c0_26], %30 {strides = array<i32>} : memref<1x4x8x8xf32, #tpu.memory_space<vmem>>, vector<1x4x8x8xf32>,
    return
  }
  func.func @transform_0(%arg0: i32, %arg1: i32, %arg2: i32) -> (i32, i32) {
    %c0_i32 = arith.constant 0 : i32
    %c0_i32_0 = arith.constant 0 : i32
    %c0_i32_1 = arith.constant 0 : i32
    return %c0_i32, %c0_i32_0 : i32, i32
  }
  func.func @transform_1(%arg0: i32, %arg1: i32, %arg2: i32) -> (i32, i32, i32, i32) {
    %c0_i32 = arith.constant 0 : i32
    %c0_i32_0 = arith.constant 0 : i32
    return %arg0, %arg1, %arg2, %c0_i32 : i32, i32, i32, i32
  }
  func.func @transform_2(%arg0: i32, %arg1: i32, %arg2: i32) -> (i32, i32, i32, i32, i32) {
    %c0_i32 = arith.constant 0 : i32
    %c0_i32_0 = arith.constant 0 : i32
    %c0_i32_1 = arith.constant 0 : i32
    return %arg0, %c0_i32, %arg1, %arg2, %c0_i32_0 : i32, i32, i32, i32, i32
  }
  func.func @transform_3(%arg0: i32, %arg1: i32, %arg2: i32) -> (i32, i32, i32, i32) {
    %c0_i32 = arith.constant 0 : i32
    %c0_i32_0 = arith.constant 0 : i32
    return %arg0, %arg1, %arg2, %c0_i32 : i32, i32, i32, i32
  }
}

</mosaic_0001>

<llo_original>
// kernel: dwt.1
$region0: #{dwt.1}
  #allocation0 [shape = 'u32[]', space=smem, size = 0x4, offset = 0x4, fixed_abs, tag = 'smem constant byte address 0x4 - core index']
  #allocation1 [shape = 'u32[144,128]{1,0:T(1,128)}', space=vmem, size = 0x12000, scoped, tag = 'internal scratch']
  %s0 = inlined_call_operand.vmem [shape: f32[16,16], index: 0, kind: input, shape index: {}]
  %s1 = inlined_call_operand.vmem [shape: f32[2,4,8,32], index: 1, kind: input, shape index: {}]
  %s2 = inlined_call_operand.vmem [shape: f32[2,4,4,8,8], index: 2, kind: output, shape index: {0}]
  %s3 = inlined_call_operand.hbm [shape: f32[2,4,8,8], index: 3, kind: output, shape index: {1}]
  %4 = xla_tuple %s2, %s3
  %s5 = sld [smem:[#allocation0]]
  $region49: #{dwt.1} parent=0
    _
  %s7 = ssub.s32 1, %s5
  %s8 = scalar_select 0, %s7, %s5
  $region1: #{dwt.1} parent=0
    #allocation2 [shape = 'u8[32768]{0}', space=vmem, size = 0x8000, scoped, tag = 'output window, operand 1']
    #allocation3 [shape = 's32[2]{0}', space=sflag, size = 0x8, scoped, tag = 'scoped memory for dwt.1']
    %9 = vsyncpa [#allocation3], 0
    %s10 = scalar_lea.sflag [#allocation3], 1
    %11 = vsyncpa %s10, 0
    loop: start=0, step=1, limit=4
    $region2: #{dwt.1} parent=1 // loop_pre_header
      _
    $region3: #{dwt.1} parent=1 // loop_header
      %s13 = sphi 0, %s17
      %p14 = scmp.ge.s32.totalorder %s13, 4
      %s20 = sphi 0, %s39
      %s21 = sphi 0, %s35
      %s22 = sphi 0, %s31
      %s23 = sphi 0, %s20
      %s24 = sphi 0, %s21
      %s25 = sphi 0, %s22
      %s26 = sphi 0, %s23
      %s27 = sphi 0, %s24
      %s28 = sphi 0, %s25
      %s40 = sphi 0, %s40
      %s42 = sphi 0, %s40
      %s43 = sphi 0, %s42
      %s57 = sphi 0, %s43
      %s67 = sphi 0, %s69
      %s70 = sphi 0, %s67
      %s71 = sphi 0, %s70
      %s87 = sphi 0, %s71
      %s97 = sphi 0, %s99
      %s100 = sphi 0, %s97
      %s101 = sphi 0, %s100
      %s117 = sphi 0, %s101
      %s127 = sphi 0, %s129
      %s130 = sphi 0, %s127
      %s131 = sphi 0, %s130
      %s147 = sphi 0, %s131
    $region4: #{dwt.1} parent=1 // loop_header_branch
      %16 = sbr.rel (%p14) target = $region8
    $region5: #{dwt.1} parent=1 // loop_body
      %s18 = ssub.s32 %s13, 1
      %s19 = ssub.s32 %s13, 2
      %s29 = sadd.s32 1, %s22
      %p30 = scmp.ge.s32.totalorder %s29, 1
      %s31 = scalar_select %p30, 0, %s29
      %s32 = sadd.s32 1, %s21
      %s33 = scalar_select %p30, %s32, %s21
      %p34 = scmp.ge.s32.totalorder %s33, 1
      %s35 = scalar_select %p34, 0, %s33
      %s36 = sadd.s32 1, %s20
      %s37 = scalar_select %p34, %s36, %s20
      %p38 = scmp.ge.s32.totalorder %s37, 2
      %s39 = scalar_select %p38, 0, %s37
      %s41 = sadd.s32 %s40, 1
      %p44 = scmp.eq.s32.totalorder %s13, 1
      %p45 = scmp.ne.s32.totalorder %s40, %s42
      %p46 = scmp.eq.s32.totalorder %s13, 0
      %p47 = por %p45, %p46
      %p48 = scmp.ne.s32.totalorder %s40, %s42
      %p49 = scmp.eq.s32.totalorder %s18, 1
      %p50 = por %p48, %p49
      %p51 = scmp.ne.s32.totalorder %s42, %s43
      %p52 = scmp.eq.s32.totalorder %s18, 0
      %p53 = por %p51, %p52
      %p54 = scmp.ne.s32.totalorder %s42, %s43
      %p55 = scmp.eq.s32.totalorder %s19, 1
      %p56 = por %p54, %p55
      %p58 = scmp.ne.s32.totalorder %s43, %s57
      %p59 = scmp.eq.s32.totalorder %s19, 0
      %p60 = por %p58, %p59
      %s61 = ssub.s32 %s20, %s39
      %s62 = ssub.s32 %s21, %s35
      %s63 = sor.u32 %s61, %s62
      %s64 = ssub.s32 %s22, %s31
      %s65 = sor.u32 %s63, %s64
      %p66 = scmp.eq.s32.totalorder %s65, 0
      %s68 = sadd.s32 %s67, 1
      %s69 = scalar_select %p66, %s67, %s68
      %p72 = pneg %p66
      %p73 = scmp.eq.s32.totalorder %s13, 1
      %p74 = por %p72, %p73
      %p75 = scmp.ne.s32.totalorder %s67, %s70
      %p76 = scmp.eq.s32.totalorder %s13, 0
      %p77 = por %p75, %p76
      %p78 = scmp.ne.s32.totalorder %s67, %s70
      %p79 = scmp.eq.s32.totalorder %s18, 1
      %p80 = por %p78, %p79
      %p81 = scmp.ne.s32.totalorder %s70, %s71
      %p82 = scmp.eq.s32.totalorder %s18, 0
      %p83 = por %p81, %p82
      %p84 = scmp.ne.s32.totalorder %s70, %s71
      %p85 = scmp.eq.s32.totalorder %s19, 1
      %p86 = por %p84, %p85
      %p88 = scmp.ne.s32.totalorder %s71, %s87
      %p89 = scmp.eq.s32.totalorder %s19, 0
      %p90 = por %p88, %p89
      %s91 = ssub.s32 %s20, %s39
      %s92 = ssub.s32 %s21, %s35
      %s93 = sor.u32 %s91, %s92
      %s94 = ssub.s32 %s22, %s31
      %s95 = sor.u32 %s93, %s94
      %p96 = scmp.eq.s32.totalorder %s95, 0
      %s98 = sadd.s32 %s97, 1
      %s99 = scalar_select %p96, %s97, %s98
      %p102 = pneg %p96
      %p103 = scmp.eq.s32.totalorder %s13, 1
      %p104 = por %p102, %p103
      %p105 = scmp.ne.s32.totalorder %s97, %s100
      %p106 = scmp.eq.s32.totalorder %s13, 0
      %p107 = por %p105, %p106
      %p108 = scmp.ne.s32.totalorder %s97, %s100
      %p109 = scmp.eq.s32.totalorder %s18, 1
      %p110 = por %p108, %p109
      %p111 = scmp.ne.s32.totalorder %s100, %s101
      %p112 = scmp.eq.s32.totalorder %s18, 0
      %p113 = por %p111, %p112
      %p114 = scmp.ne.s32.totalorder %s100, %s101
      %p115 = scmp.eq.s32.totalorder %s19, 1
      %p116 = por %p114, %p115
      %p118 = scmp.ne.s32.totalorder %s101, %s117
      %p119 = scmp.eq.s32.totalorder %s19, 0
      %p120 = por %p118, %p119
      %s121 = ssub.s32 %s20, %s39
      %s122 = ssub.s32 %s21, %s35
      %s123 = sor.u32 %s121, %s122
      %s124 = ssub.s32 %s22, %s31
      %s125 = sor.u32 %s123, %s124
      %p126 = scmp.eq.s32.totalorder %s125, 0
      %s128 = sadd.s32 %s127, 1
      %s129 = scalar_select %p126, %s127, %s128
      %p132 = pneg %p126
      %p133 = scmp.eq.s32.totalorder %s13, 1
      %p134 = por %p132, %p133
      %p135 = scmp.ne.s32.totalorder %s127, %s130
      %p136 = scmp.eq.s32.totalorder %s13, 0
      %p137 = por %p135, %p136
      %p138 = scmp.ne.s32.totalorder %s127, %s130
      %p139 = scmp.eq.s32.totalorder %s18, 1
      %p140 = por %p138, %p139
      %p141 = scmp.ne.s32.totalorder %s130, %s131
      %p142 = scmp.eq.s32.totalorder %s18, 0
      %p143 = por %p141, %p142
      %p144 = scmp.ne.s32.totalorder %s130, %s131
      %p145 = scmp.eq.s32.totalorder %s19, 1
      %p146 = por %p144, %p145
      %p148 = scmp.ne.s32.totalorder %s131, %s147
      %p149 = scmp.eq.s32.totalorder %s19, 0
      %p150 = por %p148, %p149
      %p151 = scmp.le.s32.totalorder 1, %s13
      %p152 = scmp.lt.s32.totalorder %s13, 3
      %p153 = pnand %p151, %p152
      %p154 = pneg %p153
      // Predicated region
      $region9: #{dwt.1} parent=5 // pred_check
        _
      $region10: #{dwt.1} parent=5 // pred_check_branch
        %156 = sbr.rel (%p153) target = $region12
      $region11: #{dwt.1} parent=5 // pred_region
        %s157 = ssub.s32 %s13, 1
        // Predicated region
        $region13: #{dwt.1} parent=11 // pred_check
          %p158 = pneg %p53
        $region14: #{dwt.1} parent=11 // pred_check_branch
          %160 = sbr.rel (%p158) target = $region16
        $region15: #{dwt.1} parent=11 // pred_region
          _
        $region16: #{dwt.1} parent=11 // pred_fallthru
          _
      $region12: #{dwt.1} parent=5 // pred_fallthru
        _
      %p161 = scmp.lt.s32.totalorder %s13, 2
      // Predicated region
      $region17: #{dwt.1} parent=5 // pred_check
        %p162 = pneg %p161
      $region18: #{dwt.1} parent=5 // pred_check_branch
        %164 = sbr.rel (%p162) target = $region20
      $region19: #{dwt.1} parent=5 // pred_region
        // Predicated region
        $region21: #{dwt.1} parent=19 // pred_check
          %p165 = pneg %p77
        $region22: #{dwt.1} parent=19 // pred_check_branch
          %167 = sbr.rel (%p165) target = $region24
        $region23: #{dwt.1} parent=19 // pred_region
          %s168 = smul.u32 4, %s21
          %p169 = scmp.lt.s32.totalorder %s20, 1
          %s170 = scalar_select %p169, %s20, 1
          %p171 = scmp.lt.s32.totalorder %s168, 3
          %s172 = scalar_select %p171, %s168, 3
          %p173 = scmp.lt.s32.totalorder %s22, 0
          %s174 = scalar_select %p173, %s22, 0
          %s175 = sadd.s32 %s174, %s172
          %s176 = smul.addr %s170, 4
          %s177 = sadd.s32 %s175, %s176
          %s178 = smul.addr %s177, 8
          %s179 = scalar_lea.vmem %s1, %s178
          %s180 = smul.u32 4, %s21
        $region24: #{dwt.1} parent=19 // pred_fallthru
          _
      $region20: #{dwt.1} parent=5 // pred_fallthru
        _
      %p181 = scmp.le.s32.totalorder 1, %s13
      %p182 = scmp.lt.s32.totalorder %s13, 3
      %p183 = pnand %p181, %p182
      %p184 = pneg %p183
      // Predicated region
      $region25: #{dwt.1} parent=5 // pred_check
        _
      $region26: #{dwt.1} parent=5 // pred_check_branch
        %186 = sbr.rel (%p183) target = $region28
      $region27: #{dwt.1} parent=5 // pred_region
        %s187 = ssub.s32 %s13, 1
        %p188 = pneg %p53
        %p189 = pneg %p50
        %s190 = smul.u32 4, %s24
        %p191 = scmp.lt.s32.totalorder %s23, 1
        %s192 = scalar_select %p191, %s23, 1
        %p193 = scmp.lt.s32.totalorder %s190, 3
        %s194 = scalar_select %p193, %s190, 3
        %p195 = scmp.lt.s32.totalorder %s25, 0
        %s196 = scalar_select %p195, %s25, 0
        %s197 = sadd.s32 %s196, %s194
        %s198 = smul.addr %s192, 4
        %s199 = sadd.s32 %s197, %s198
        %s200 = smul.addr %s199, 8
        %s201 = scalar_lea.vmem %s1, %s200
        %p202 = pneg %p83
        %p203 = pneg %p80
        %p204 = pneg %p113
        %p205 = pneg %p110
        %s206 = smul.u32 4, %s24
        %p207 = scmp.lt.s32.totalorder %s23, 1
        %s208 = scalar_select %p207, %s23, 1
        %p209 = scmp.lt.s32.totalorder %s206, 3
        %s210 = scalar_select %p209, %s206, 3
        %p211 = scmp.lt.s32.totalorder %s25, 0
        %s212 = scalar_select %p211, %s25, 0
        %s213 = sadd.s32 %s212, %s210
        %s214 = smul.addr %s208, 16
        %s215 = sadd.s32 %s213, %s214
        %s216 = smul.addr %s215, 8
        %s217 = scalar_lea.vmem %s2, %s216
        %p218 = pneg %p143
        %p219 = pneg %p140
        %s220 = sand.u32 %s130, 1
        %s221 = scalar_lea.sflag [#allocation3], %s220
        %s222 = sand.u32 %s130, 1
        %s223 = smul.addr %s222, 32
        %s224 = scalar_lea.vmem [#allocation2], %s223
        %s225 = smul.u32 4, %s24
        %p226 = scmp.lt.s32.totalorder %s23, 1
        %s227 = scalar_select %p226, %s23, 1
        %p228 = scmp.lt.s32.totalorder %s225, 3
        %s229 = scalar_select %p228, %s225, 3
        %p230 = scmp.lt.s32.totalorder %s25, 0
        %s231 = scalar_select %p230, %s25, 0
        %s232 = sadd.s32 %s231, %s229
        %s233 = smul.addr %s227, 4
        %s234 = sadd.s32 %s232, %s233
        %s235 = smul.addr %s234, 8
        %s236 = scalar_lea.vmem %s1, %s235
        %s237 = smul.u32 4, %s24
        %s238 = smul.u32 4, %s24
        %p239 = scmp.lt.s32.totalorder %s23, 1
        %s240 = scalar_select %p239, %s23, 1
        %p241 = scmp.lt.s32.totalorder %s238, 3
        %s242 = scalar_select %p241, %s238, 3
        %p243 = scmp.lt.s32.totalorder %s25, 0
        %s244 = scalar_select %p243, %s25, 0
        %s245 = sadd.s32 %s244, %s242
        %s246 = smul.addr %s240, 16
        %s247 = sadd.s32 %s245, %s246
        %s248 = smul.addr %s247, 8
        %s249 = scalar_lea.vmem %s2, %s248
        %s250 = smul.u32 4, %s24
        %s251 = smul.u32 4, %s24
        %v252 = vld [vmem:[%s0] sm:$0xff]
        %v253 = vld [vmem:[%s0 + $0x8] sm:$0xff]
        %v254 = vld [vmem:[%s236] sm:$0xff]
        %v255 = vld [vmem:[%s236 + $0x8] sm:$0xff]
        %v256 = vld [vmem:[%s236 + $0x10] sm:$0xff]
        %v257 = vld [vmem:[%s236 + $0x18] sm:$0xff]
        %vm258 = vcmask 130048
        %v260 = vsel %vm258, %v254, 0
        %v263 = vsel %vm258, %v255, 0
        %v266 = vsel %vm258, %v256, 0
        %v269 = vsel %vm258, %v257, 0
        %271 = vmatprep.subr.mxu0 0.0
        %272 = vmatpush1.msra.mxu0 %v252
        %273 = vmatprep.subr.mxu0 0.0
        %274 = vmatpush1.msra.mxu0 %v253
        %275 = vmatprep.subr.mxu0 0.0
        %276 = vmatpush1.msra.mxu0 0.0
        %277 = vmatprep.subr.mxu0 0.0
        %278 = vmatpush1.msra.mxu0 0.0
        %279 = vmatprep.subr.mxu0 0.0
        %280 = vmatpush1.msra.mxu0 0.0
        %281 = vmatprep.subr.mxu0 0.0
        %282 = vmatpush1.msra.mxu0 0.0
        %283 = vmatprep.subr.mxu0 0.0
        %284 = vmatpush1.msra.mxu0 0.0
        %285 = vmatprep.subr.mxu0 0.0
        %286 = vmatpush1.msra.mxu0 0.0
        %287 = vmatprep.subr.mxu0 0.0
        %288 = vmatpush1.msra.mxu0 0.0
        %289 = vmatprep.subr.mxu0 0.0
        %290 = vmatpush1.msra.mxu0 0.0
        %291 = vmatprep.subr.mxu0 0.0
        %292 = vmatpush1.msra.mxu0 0.0
        %293 = vmatprep.subr.mxu0 0.0
        %294 = vmatpush1.msra.mxu0 0.0
        %295 = vmatprep.subr.mxu0 0.0
        %296 = vmatpush1.msra.mxu0 0.0
        %297 = vmatprep.subr.mxu0 0.0
        %298 = vmatpush1.msra.mxu0 0.0
        %299 = vmatprep.subr.mxu0 0.0
        %300 = vmatpush1.msra.mxu0 0.0
        %301 = vmatprep.subr.mxu0 0.0
        %302 = vmatpush1.msra.mxu0 0.0
        %303 = vmatprep.subr.mxu0 0.0
        %304 = vmatpush1.msra.mxu0 0.0
        %305 = vmatprep.subr.mxu0 0.0
        %306 = vmatpush1.msra.mxu0 0.0
        %307 = vmatprep.subr.mxu0 0.0
        %308 = vmatpush1.msra.mxu0 0.0
        %309 = vmatprep.subr.mxu0 0.0
        %310 = vmatpush1.msra.mxu0 0.0
        %311 = vmatprep.subr.mxu0 0.0
        %312 = vmatpush1.msra.mxu0 0.0
        %313 = vmatprep.subr.mxu0 0.0
        %314 = vmatpush1.msra.mxu0 0.0
        %315 = vmatprep.subr.mxu0 0.0
        %316 = vmatpush1.msra.mxu0 0.0
        %317 = vmatprep.subr.mxu0 0.0
        %318 = vmatpush1.msra.mxu0 0.0
        %319 = vmatprep.subr.mxu0 0.0
        %320 = vmatpush1.msra.mxu0 0.0
        %321 = vmatprep.subr.mxu0 0.0
        %322 = vmatpush1.msra.mxu0 0.0
        %323 = vmatprep.subr.mxu0 0.0
        %324 = vmatpush1.msra.mxu0 0.0
        %325 = vmatprep.subr.mxu0 0.0
        %326 = vmatpush1.msra.mxu0 0.0
        %327 = vmatprep.subr.mxu0 0.0
        %328 = vmatpush1.msra.mxu0 0.0
        %329 = vmatprep.subr.mxu0 0.0
        %330 = vmatpush1.msra.mxu0 0.0
        %331 = vmatprep.subr.mxu0 0.0
        %332 = vmatpush1.msra.mxu0 0.0
        %333 = vmatprep.subr.mxu0 0.0
        %334 = vmatpush1.msra.mxu0 0.0
        %335 = vmatprep.mubr.f32.mxu0 0.0
        %336 = vmatmul.mubr.f32.gmra.mrb[0].mxu0 %v260
        %v337 = vpop.f32.mrb[0].mxu0
        %v338 = vadd.f32 0.0, %v337
        %v339 = vpop.f32.mrb[0].mxu0
        %340 = vmatprep.mubr.f32.mxu0 0.0
        %341 = vmatmul.mubr.f32.gmra.mrb[0].mxu0 %v263
        %v342 = vpop.f32.mrb[0].mxu0
        %v343 = vadd.f32 0.0, %v342
        %v344 = vpop.f32.mrb[0].mxu0
        %345 = vmatprep.mubr.f32.mxu0 0.0
        %346 = vmatmul.mubr.f32.gmra.mrb[0].mxu0 %v266
        %v347 = vpop.f32.mrb[0].mxu0
        %v348 = vadd.f32 0.0, %v347
        %v349 = vpop.f32.mrb[0].mxu0
        %350 = vmatprep.mubr.f32.mxu0 0.0
        %351 = vmatmul.mubr.f32.gmra.mrb[0].mxu0 %v269
        %v352 = vpop.f32.mrb[0].mxu0
        %v353 = vadd.f32 0.0, %v352
        %v354 = vpop.f32.mrb[0].mxu0
        %355 = vdwg.mxu0
        %356 = vrot.lane.b32.xlu0 %v254, 112
        %v357 = vpop.permute.xlu0 %356
        %358 = vrot.lane.b32.xlu0 %v255, 112
        %v359 = vpop.permute.xlu0 %358
        %360 = vrot.lane.b32.xlu0 %v256, 112
        %v361 = vpop.permute.xlu0 %360
        %362 = vrot.lane.b32.xlu0 %v257, 112
        %v363 = vpop.permute.xlu0 %362
        %v364 = vsel %vm258, %v357, 0
        %v366 = vsel %vm258, %v359, 0
        %v368 = vsel %vm258, %v361, 0
        %v370 = vsel %vm258, %v363, 0
        %372 = vmatprep.subr.mxu0 0.0
        %373 = vmatpush1.msra.mxu0 %v252
        %374 = vmatprep.subr.mxu0 0.0
        %375 = vmatpush1.msra.mxu0 %v253
        %376 = vmatprep.subr.mxu0 0.0
        %377 = vmatpush1.msra.mxu0 0.0
        %378 = vmatprep.subr.mxu0 0.0
        %379 = vmatpush1.msra.mxu0 0.0
        %380 = vmatprep.subr.mxu0 0.0
        %381 = vmatpush1.msra.mxu0 0.0
        %382 = vmatprep.subr.mxu0 0.0
        %383 = vmatpush1.msra.mxu0 0.0
        %384 = vmatprep.subr.mxu0 0.0
        %385 = vmatpush1.msra.mxu0 0.0
        %386 = vmatprep.subr.mxu0 0.0
        %387 = vmatpush1.msra.mxu0 0.0
        %388 = vmatprep.subr.mxu0 0.0
        %389 = vmatpush1.msra.mxu0 0.0
        %390 = vmatprep.subr.mxu0 0.0
        %391 = vmatpush1.msra.mxu0 0.0
        %392 = vmatprep.subr.mxu0 0.0
        %393 = vmatpush1.msra.mxu0 0.0
        %394 = vmatprep.subr.mxu0 0.0
        %395 = vmatpush1.msra.mxu0 0.0
        %396 = vmatprep.subr.mxu0 0.0
        %397 = vmatpush1.msra.mxu0 0.0
        %398 = vmatprep.subr.mxu0 0.0
        %399 = vmatpush1.msra.mxu0 0.0
        %400 = vmatprep.subr.mxu0 0.0
        %401 = vmatpush1.msra.mxu0 0.0
        %402 = vmatprep.subr.mxu0 0.0
        %403 = vmatpush1.msra.mxu0 0.0
        %404 = vmatprep.subr.mxu0 0.0
        %405 = vmatpush1.msra.mxu0 0.0
        %406 = vmatprep.subr.mxu0 0.0
        %407 = vmatpush1.msra.mxu0 0.0
        %408 = vmatprep.subr.mxu0 0.0
        %409 = vmatpush1.msra.mxu0 0.0
        %410 = vmatprep.subr.mxu0 0.0
        %411 = vmatpush1.msra.mxu0 0.0
        %412 = vmatprep.subr.mxu0 0.0
        %413 = vmatpush1.msra.mxu0 0.0
        %414 = vmatprep.subr.mxu0 0.0
        %415 = vmatpush1.msra.mxu0 0.0
        %416 = vmatprep.subr.mxu0 0.0
        %417 = vmatpush1.msra.mxu0 0.0
        %418 = vmatprep.subr.mxu0 0.0
        %419 = vmatpush1.msra.mxu0 0.0
        %420 = vmatprep.subr.mxu0 0.0
        %421 = vmatpush1.msra.mxu0 0.0
        %422 = vmatprep.subr.mxu0 0.0
        %423 = vmatpush1.msra.mxu0 0.0
        %424 = vmatprep.subr.mxu0 0.0
        %425 = vmatpush1.msra.mxu0 0.0
        %426 = vmatprep.subr.mxu0 0.0
        %427 = vmatpush1.msra.mxu0 0.0
        %428 = vmatprep.subr.mxu0 0.0
        %429 = vmatpush1.msra.mxu0 0.0
        %430 = vmatprep.subr.mxu0 0.0
        %431 = vmatpush1.msra.mxu0 0.0
        %432 = vmatprep.subr.mxu0 0.0
        %433 = vmatpush1.msra.mxu0 0.0
        %434 = vmatprep.subr.mxu0 0.0
        %435 = vmatpush1.msra.mxu0 0.0
        %436 = vmatprep.mubr.f32.mxu0 0.0
        %437 = vmatmul.mubr.f32.gmra.mrb[0].mxu0 %v364
        %v438 = vpop.f32.mrb[0].mxu0
        %v439 = vadd.f32 0.0, %v438
        %v440 = vpop.f32.mrb[0].mxu0
        %441 = vmatprep.mubr.f32.mxu0 0.0
        %442 = vmatmul.mubr.f32.gmra.mrb[0].mxu0 %v366
        %v443 = vpop.f32.mrb[0].mxu0
        %v444 = vadd.f32 0.0, %v443
        %v445 = vpop.f32.mrb[0].mxu0
        %446 = vmatprep.mubr.f32.mxu0 0.0
        %447 = vmatmul.mubr.f32.gmra.mrb[0].mxu0 %v368
        %v448 = vpop.f32.mrb[0].mxu0
        %v449 = vadd.f32 0.0, %v448
        %v450 = vpop.f32.mrb[0].mxu0
        %451 = vmatprep.mubr.f32.mxu0 0.0
        %452 = vmatmul.mubr.f32.gmra.mrb[0].mxu0 %v370
        %v453 = vpop.f32.mrb[0].mxu0
        %v454 = vadd.f32 0.0, %v453
        %v455 = vpop.f32.mrb[0].mxu0
        %456 = vdwg.mxu0
        %v457 = vadd.f32 %v338, %v439
        %v458 = vadd.f32 %v343, %v444
        %v459 = vadd.f32 %v348, %v449
        %v460 = vadd.f32 %v353, %v454
        %v461 = vsub.f32 %v439, %v338
        %v462 = vsub.f32 %v444, %v343
        %v463 = vsub.f32 %v449, %v348
        %v464 = vsub.f32 %v454, %v353
        %vm465 = vcmask 64512
        %466 = vst.msk [vmem:[%s249] sm:$0xff] %vm465, %v457
        %467 = vst.msk [vmem:[%s249 + $0x8] sm:$0xff] %vm465, %v458
        %468 = vst.msk [vmem:[%s249 + $0x10] sm:$0xff] %vm465, %v459
        %469 = vst.msk [vmem:[%s249 + $0x18] sm:$0xff] %vm465, %v460
        %474 = vrot.lane.b32.xlu0 %v457, 120
        %v475 = vpop.permute.xlu0 %474
        %476 = vrot.lane.b32.xlu0 %v458, 120
        %v477 = vpop.permute.xlu0 %476
        %478 = vrot.lane.b32.xlu0 %v459, 120
        %v479 = vpop.permute.xlu0 %478
        %480 = vrot.lane.b32.xlu0 %v460, 120
        %v481 = vpop.permute.xlu0 %480
        %s486 = scalar_lea.vmem %s249, 32
        %487 = vst.msk [vmem:[%s486] sm:$0xff] %vm465, %v475
        %488 = vst.msk [vmem:[%s486 + $0x8] sm:$0xff] %vm465, %v477
        %489 = vst.msk [vmem:[%s486 + $0x10] sm:$0xff] %vm465, %v479
        %490 = vst.msk [vmem:[%s486 + $0x18] sm:$0xff] %vm465, %v481
        %s491 = scalar_lea.vmem %s249, 64
        %492 = vst.msk [vmem:[%s491] sm:$0xff] %vm465, %v461
        %493 = vst.msk [vmem:[%s491 + $0x8] sm:$0xff] %vm465, %v462
        %494 = vst.msk [vmem:[%s491 + $0x10] sm:$0xff] %vm465, %v463
        %495 = vst.msk [vmem:[%s491 + $0x18] sm:$0xff] %vm465, %v464
        %500 = vrot.lane.b32.xlu0 %v461, 120
        %v501 = vpop.permute.xlu0 %500
        %502 = vrot.lane.b32.xlu0 %v462, 120
        %v503 = vpop.permute.xlu0 %502
        %504 = vrot.lane.b32.xlu0 %v463, 120
        %v505 = vpop.permute.xlu0 %504
        %506 = vrot.lane.b32.xlu0 %v464, 120
        %v507 = vpop.permute.xlu0 %506
        %s512 = scalar_lea.vmem %s249, 96
        %513 = vst.msk [vmem:[%s512] sm:$0xff] %vm465, %v501
        %514 = vst.msk [vmem:[%s512 + $0x8] sm:$0xff] %vm465, %v503
        %515 = vst.msk [vmem:[%s512 + $0x10] sm:$0xff] %vm465, %v505
        %516 = vst.msk [vmem:[%s512 + $0x18] sm:$0xff] %vm465, %v507
        %517 = vst.msk [vmem:[%s224] sm:$0xff] %vm465, %v457
        %518 = vst.msk [vmem:[%s224 + $0x8] sm:$0xff] %vm465, %v458
        %519 = vst.msk [vmem:[%s224 + $0x10] sm:$0xff] %vm465, %v459
        %520 = vst.msk [vmem:[%s224 + $0x18] sm:$0xff] %vm465, %v460
        %s521 = smul.u32 4, %s24
        %p522 = scmp.lt.s32.totalorder %s23, 1
        %s523 = scalar_select %p522, %s23, 1
        %p524 = scmp.lt.s32.totalorder %s521, 3
        %s525 = scalar_select %p524, %s521, 3
        %p526 = scmp.lt.s32.totalorder %s25, 0
        %s527 = scalar_select %p526, %s25, 0
        %s528 = sadd.s32 %s527, %s525
        %s529 = smul.addr %s523, 16
        %s530 = sadd.s32 %s528, %s529
        %s531 = smul.addr %s530, 8
        %s532 = scalar_lea.vmem %s2, %s531
        %s533 = sand.u32 %s130, 1
        %s534 = scalar_lea.sflag [#allocation3], %s533
        %s535 = sand.u32 %s130, 1
        %s536 = smul.addr %s535, 32
        %s537 = scalar_lea.vmem [#allocation2], %s536
        // Predicated region
        $region29: #{dwt.1} parent=27 // pred_check
          %p538 = pneg %p110
        $region30: #{dwt.1} parent=27 // pred_check_branch
          %540 = sbr.rel (%p538) target = $region32
        $region31: #{dwt.1} parent=27 // pred_region
          %s541 = smul.u32 4, %s24
        $region32: #{dwt.1} parent=27 // pred_fallthru
          _
        // Predicated region
        $region33: #{dwt.1} parent=27 // pred_check
          %p542 = pneg %p140
        $region34: #{dwt.1} parent=27 // pred_check_branch
          %544 = sbr.rel (%p542) target = $region36
        $region35: #{dwt.1} parent=27 // pred_region
          %s545 = smul.u32 4, %s24
          %s547 = ssub.s32 512, 512
          %548 = vsyncadd %s534, %s547
          %s549 = sadd.s32 %s25, %s545
          %s550 = smul.addr %s23, 4
          %s551 = sadd.s32 %s549, %s550
          %s552 = smul.addr %s551, 128
          %s553 = scalar_lea.hbm %s3, %s552
          %s554 = sshll.u32 %s537, 4
          %s555 = int_to_ptr.vmem [resolvable:$true] %s554
          %560 = dma.vmem_to_hbm [thread:$0]  %s555, 512, %s553, %s534, 128, 128, 8
        $region36: #{dwt.1} parent=27 // pred_fallthru
          _
      $region28: #{dwt.1} parent=5 // pred_fallthru
        _
      %p561 = scmp.le.s32.totalorder 2, %s13
      // Predicated region
      $region37: #{dwt.1} parent=5 // pred_check
        %p562 = pneg %p561
      $region38: #{dwt.1} parent=5 // pred_check_branch
        %564 = sbr.rel (%p562) target = $region40
      $region39: #{dwt.1} parent=5 // pred_region
        %s565 = ssub.s32 %s13, 2
        // Predicated region
        $region41: #{dwt.1} parent=39 // pred_check
          %p566 = pneg %p116
        $region42: #{dwt.1} parent=39 // pred_check_branch
          %568 = sbr.rel (%p566) target = $region44
        $region43: #{dwt.1} parent=39 // pred_region
          %s569 = smul.u32 4, %s27
          %p570 = scmp.lt.s32.totalorder %s26, 1
          %s571 = scalar_select %p570, %s26, 1
          %p572 = scmp.lt.s32.totalorder %s569, 3
          %s573 = scalar_select %p572, %s569, 3
          %p574 = scmp.lt.s32.totalorder %s28, 0
          %s575 = scalar_select %p574, %s28, 0
          %s576 = sadd.s32 %s575, %s573
          %s577 = smul.addr %s571, 16
          %s578 = sadd.s32 %s576, %s577
          %s579 = smul.addr %s578, 8
          %s580 = scalar_lea.vmem %s2, %s579
        $region44: #{dwt.1} parent=39 // pred_fallthru
          _
        // Predicated region
        $region45: #{dwt.1} parent=39 // pred_check
          %p581 = pneg %p146
        $region46: #{dwt.1} parent=39 // pred_check_branch
          %583 = sbr.rel (%p581) target = $region48
        $region47: #{dwt.1} parent=39 // pred_region
          %s584 = sand.u32 %s131, 1
          %s585 = scalar_lea.sflag [#allocation3], %s584
          %s586 = sand.u32 %s131, 1
          %s587 = smul.addr %s586, 32
          %s588 = scalar_lea.vmem [#allocation2], %s587
          %589 = dma.done %s585, 512
        $region48: #{dwt.1} parent=39 // pred_fallthru
          _
      $region40: #{dwt.1} parent=5 // pred_fallthru
        _
    $region6: #{dwt.1} parent=1 // loop_footer
      %s17 = sadd.s32 1, %s13
    $region7: #{dwt.1} parent=1 // loop_footer_branch
      %12 = sbr.rel target = $region3
    $region8: #{dwt.1} parent=1 // loop_exit
      _
    %590 = vsyncpa [#allocation3], 1
    %s591 = scalar_lea.sflag [#allocation3], 1
    %592 = vsyncpa %s591, 1

</llo_original>
